<compile_context>
chip_gen: v5e
topology: v5e:2x2
jax: 0.10.0
libtpu: 0.0.40
codegen_flags: <defaults>
</compile_context>

<pallas_src>
import jax
import jax.numpy as jnp
from jax.experimental import pallas as pl
from jax.experimental.pallas import tpu as pltpu


def _discriminator_kernel(bias_ref, v_ref, h_ref, out_ref):
    # bias_ref: (1,) f32 in SMEM
    # v_ref   : (1, B, H)       -- context for this quarter, already W-transformed
    # h_ref   : (1, B, tile_n, H)
    # out_ref : (1, B, tile_n)
    bias = bias_ref[0]
    v = v_ref[0]                                  # (B, H)
    h = h_ref[0]                                  # (B, tile_n, H)
    # One VPU multiply + one lane (H) reduction; bias add is ~free filler.
    out_ref[0] = jnp.sum(h * v[:, None, :], axis=-1) + bias


def _pick_tile_n(n):
    # Largest "nice" tile <= 512 that evenly divides N (multiple of 128 keeps
    # the output store lane-dense and the h tile (8,128)-aligned).  512 at
    # H=512/f32/B=2 is ~2 MiB per h tile (x2 double-buffering), comfortably
    # inside scoped VMEM on v5e (16 MiB), v6e (32 MiB) and v7x (32/64 MiB).
    for t in (512, 256, 128):
        if n >= t and n % t == 0:
            return t
    return n  # small N: take the whole axis (full-extent block is allowed)


def discriminator_forward(W, bias, c1, c2, h1, h2, h3, h4):
    B, N, H = h1.shape
    dtype = h1.dtype

    # ---- wrapper-side layout plumbing (plain XLA, outside the kernel) ----
    # Hoist the bilinear context transform: v[b,:] = W @ c[b,:] == c[b,:] @ W.T
    v1 = jnp.dot(c1, W.T)                                   # (B, H)
    v2 = jnp.dot(c2, W.T)                                   # (B, H)
    # Quarter order matches the PyTorch concat order [h2, h1, h4, h3]:
    #   q=0 -> (h2, c1), q=1 -> (h1, c2), q=2 -> (h4, c1), q=3 -> (h3, c2)
    v_stack = jnp.stack([v1, v2, v1, v2], axis=0).astype(dtype)   # (4, B, H)
    h_stack = jnp.stack([h2, h1, h4, h3], axis=0)                 # (4, B, N, H)

    tile_n = _pick_tile_n(N)
    grid = (4, N // tile_n)

    out = pl.pallas_call(
        _discriminator_kernel,
        out_shape=jax.ShapeDtypeStruct((4, B, N), jnp.float32),
        grid=grid,
        in_specs=[
            # bias: whole (1,) array resident in SMEM for the whole kernel.
            pl.BlockSpec(memory_space=pltpu.MemorySpace.SMEM),
            # per-quarter context (tiny, re-fetched per step is negligible).
            pl.BlockSpec((1, B, H), lambda q, n: (q, 0, 0)),
            # dominant stream: one (B, tile_n, H) tile of the selected quarter.
            pl.BlockSpec((1, B, tile_n, H), lambda q, n: (q, 0, n, 0)),
        ],
        out_specs=pl.BlockSpec((1, B, tile_n), lambda q, n: (q, 0, n)),
        compiler_params=pltpu.CompilerParams(
            # Independent work per (quarter, N-tile): lets v7x use both TCs.
            dimension_semantics=("parallel", "parallel"),
            # Tiles are sized small; 32 MiB is safe on all generations
            # (above v5e's 16 MiB default, below v7x's 64 MiB physical).
            vmem_limit_bytes=32 * 1024 * 1024,
        ),
    )(bias, v_stack, h_stack)

    # (4, B, N) -> (B, 4N) in the PyTorch concat order (free layout in XLA).
    return jnp.transpose(out, (1, 0, 2)).reshape(B, 4 * N)


def _reference(W, bias, c1, c2, h1, h2, h3, h4):
    def f_k(h, c):
        v = jnp.einsum('ij,bj->bi', W, c)                 # (B, H)
        return jnp.einsum('bnh,bh->bn', h, v) + bias[0]   # (B, N)
    return jnp.concatenate(
        [f_k(h2, c1), f_k(h1, c2), f_k(h4, c1), f_k(h3, c2)], axis=1)


if __name__ == "__main__":
    key = jax.random.PRNGKey(0)
    B, N, H = 2, 8, 32   # batch, nodes per graph, hidden dim (n_h)

    ks = jax.random.split(key, 7)
    c1 = jax.random.normal(ks[0], (B, H), jnp.float32)
    c2 = jax.random.normal(ks[1], (B, H), jnp.float32)
    h1 = jax.random.normal(ks[2], (B, N, H), jnp.float32)
    h2 = jax.random.normal(ks[3], (B, N, H), jnp.float32)
    h3 = jax.random.normal(ks[4], (B, N, H), jnp.float32)
    h4 = jax.random.normal(ks[5], (B, N, H), jnp.float32)

    # nn.Bilinear weight (1, H, H) with xavier_uniform; bias.data.fill_(0.0)
    bound = (6.0 / (H * H + H)) ** 0.5
    W = jax.random.uniform(ks[6], (H, H), jnp.float32, -bound, bound)
    bias = jnp.zeros((1,), jnp.float32)

    logits = discriminator_forward(W, bias, c1, c2, h1, h2, h3, h4)
    jax.block_until_ready(logits)

    assert logits.shape == (B, 4 * N), logits.shape
    ref = _reference(W, bias, c1, c2, h1, h2, h3, h4)
    assert jnp.allclose(logits, ref, atol=1e-5, rtol=1e-5)
    print("KERNEL_OK")
</pallas_src>

<mosaic_0001>
module attributes {stable_mosaic.version = 11 : i64} {
  func.func @_discriminator_kernel(%arg0: i32, %arg1: i32, %arg2: memref<1xf32, #tpu.memory_space<smem>>, %arg3: memref<1x2x32xf32, #tpu.memory_space<vmem>>, %arg4: memref<1x2x8x32xf32, #tpu.memory_space<vmem>>, %arg5: memref<1x2x8xf32, #tpu.memory_space<vmem>>) attributes {dimension_semantics = [#tpu.dimension_semantics<parallel>, #tpu.dimension_semantics<parallel>], iteration_bounds = array<i64: 4, 1>, scalar_prefetch = 0 : i64, scratch_operands = 0 : i64, tpu.core_type = #tpu.core_type<tc>, window_params = [{transform_indices = @transform_0, window_bounds = array<i64: 1>}, {transform_indices = @transform_1, window_bounds = array<i64: 1, 2, 32>}, {transform_indices = @transform_2, window_bounds = array<i64: 1, 2, 8, 32>}, {transform_indices = @transform_3, window_bounds = array<i64: 1, 2, 8>}]} {
    %c0 = arith.constant 0 : index
    %0 = memref.load %arg2[%c0] : memref<1xf32, #tpu.memory_space<smem>>
    %c0_0 = arith.constant 0 : index
    %c0_1 = arith.constant 0 : index
    %c0_2 = arith.constant 0 : index
    %1 = vector.load %arg3[%c0_0, %c0_1, %c0_2] : memref<1x2x32xf32, #tpu.memory_space<vmem>>, vector<1x2x32xf32>
    %2 = vector.shape_cast %1 : vector<1x2x32xf32> to vector<2x32xf32>
    %c0_3 = arith.constant 0 : index
    %c0_4 = arith.constant 0 : index
    %c0_5 = arith.constant 0 : index
    %c0_6 = arith.constant 0 : index
    %3 = vector.load %arg4[%c0_3, %c0_4, %c0_5, %c0_6] : memref<1x2x8x32xf32, #tpu.memory_space<vmem>>, vector<1x2x8x32xf32>
    %4 = vector.shape_cast %3 : vector<1x2x8x32xf32> to vector<2x8x32xf32>
    %5 = vector.shape_cast %2 : vector<2x32xf32> to vector<2x1x32xf32>
    %6 = vector.broadcast %5 : vector<2x1x32xf32> to vector<2x8x32xf32>
    %7 = arith.mulf %4, %6 : vector<2x8x32xf32>
    %cst = arith.constant dense<0.000000e+00> : vector<2x8xf32>
    %8 = vector.multi_reduction <add>, %7, %cst [2] : vector<2x8x32xf32> to vector<2x8xf32>
    %9 = vector.broadcast %0 : f32 to vector<2x8xf32>
    %10 = arith.addf %8, %9 : vector<2x8xf32>
    %c0_7 = arith.constant 0 : index
    %c0_8 = arith.constant 0 : index
    %c0_9 = arith.constant 0 : index
    %11 = vector.load %arg5[%c0_7, %c0_8, %c0_9] : memref<1x2x8xf32, #tpu.memory_space<vmem>>, vector<1x2x8xf32>
    %12 = vector.shape_cast %11 : vector<1x2x8xf32> to vector<2x8xf32>
    %13 = vector.shape_cast %10 : vector<2x8xf32> to vector<1x2x8xf32>
    tpu.vector_store %arg5[%c0_7, %c0_8, %c0_9], %13 {strides = array<i32>} : memref<1x2x8xf32, #tpu.memory_space<vmem>>, vector<1x2x8xf32>,
    return
  }
  func.func @transform_0(%arg0: i32, %arg1: i32) -> i32 {
    %c0_i32 = arith.constant 0 : i32
    %c0_i32_0 = arith.constant 0 : i32
    return %c0_i32 : i32
  }
  func.func @transform_1(%arg0: i32, %arg1: i32) -> (i32, i32, i32) {
    %c0_i32 = arith.constant 0 : i32
    %c0_i32_0 = arith.constant 0 : i32
    %c0_i32_1 = arith.constant 0 : i32
    return %arg0, %c0_i32, %c0_i32_0 : i32, i32, i32
  }
  func.func @transform_2(%arg0: i32, %arg1: i32) -> (i32, i32, i32, i32) {
    %c0_i32 = arith.constant 0 : i32
    %c0_i32_0 = arith.constant 0 : i32
    %c0_i32_1 = arith.constant 0 : i32
    return %arg0, %c0_i32, %arg1, %c0_i32_0 : i32, i32, i32, i32
  }
  func.func @transform_3(%arg0: i32, %arg1: i32) -> (i32, i32, i32) {
    %c0_i32 = arith.constant 0 : i32
    %c0_i32_0 = arith.constant 0 : i32
    return %arg0, %c0_i32, %arg1 : i32, i32, i32
  }
}

</mosaic_0001>

<llo_original>
// kernel: tpu_custom_call.1
$region0: #{tpu_custom_call.1}
  #allocation0 [shape = 'u32[]', space=smem, size = 0x4, offset = 0x4, fixed_abs, tag = 'smem constant byte address 0x4 - core index']
  #allocation1 [shape = 'u32[72,128]{1,0:T(1,128)}', space=vmem, size = 0x9000, scoped, tag = 'internal scratch']
  #allocation2 [shape = 'f32[1]{0:T(128)S(6)}', space=smem, size = 0x200, scoped, tag = 'scoped memory for tpu_custom_call.1']
  %s0 = inlined_call_operand.<no memory space> [shape: f32[1], index: 0, kind: input, shape index: {}]
  %s1 = inlined_call_operand.hbm [shape: f32[4,2,32], index: 1, kind: input, shape index: {}]
  %s2 = inlined_call_operand.hbm [shape: f32[4,2,8,32], index: 2, kind: input, shape index: {}]
  %s3 = inlined_call_operand.hbm [shape: f32[4,2,8], index: 3, kind: output, shape index: {}]
  %s4 = sld [smem:[#allocation0]]
  $region53: #{tpu_custom_call.1} parent=0
    _
  %s6 = ssub.s32 1, %s4
  %s7 = scalar_select 0, %s6, %s4
  %8 = sst [smem:[#allocation2]] %s0
  $region1: #{tpu_custom_call.1} parent=0
    #allocation3 [shape = 'u8[2048]{0}', space=vmem, size = 0x800, scoped, tag = 'input window, operand 1']
    #allocation4 [shape = 's32[2]{0}', space=sflag, size = 0x8, scoped, tag = 'scoped memory for tpu_custom_call.1']
    #allocation5 [shape = 's32[2]{0}', space=sflag, size = 0x8, scoped, tag = 'scoped memory for tpu_custom_call.1']
    #allocation6 [shape = 'u8[16384]{0}', space=vmem, size = 0x4000, scoped, tag = 'input window, operand 2']
    #allocation7 [shape = 's32[2]{0}', space=sflag, size = 0x8, scoped, tag = 'scoped memory for tpu_custom_call.1']
    #allocation8 [shape = 'u8[2048]{0}', space=vmem, size = 0x800, scoped, tag = 'output window, operand 0']
    %9 = vsyncpa [#allocation4], 0
    %s10 = scalar_lea.sflag [#allocation4], 1
    %11 = vsyncpa %s10, 0
    %12 = vsyncpa [#allocation7], 0
    %s13 = scalar_lea.sflag [#allocation7], 1
    %14 = vsyncpa %s13, 0
    %15 = vsyncpa [#allocation5], 0
    %s16 = scalar_lea.sflag [#allocation5], 1
    %17 = vsyncpa %s16, 0
    loop: start=0, step=1, limit=6
    $region2: #{tpu_custom_call.1} parent=1 // loop_pre_header
      _
    $region3: #{tpu_custom_call.1} parent=1 // loop_header
      %s19 = sphi 0, %s23
      %p20 = scmp.ge.s32.totalorder %s19, 6
      %s26 = sphi 0, %s38
      %s27 = sphi 0, %s34
      %s28 = sphi 0, %s26
      %s29 = sphi 0, %s27
      %s30 = sphi 0, %s28
      %s31 = sphi 0, %s29
      %s39 = sphi 0, %s39
      %s41 = sphi 0, %s39
      %s42 = sphi 0, %s41
      %s56 = sphi 0, %s42
      %s62 = sphi 0, %s64
      %s65 = sphi 0, %s62
      %s66 = sphi 0, %s65
      %s82 = sphi 0, %s66
      %s90 = sphi 0, %s92
      %s93 = sphi 0, %s90
      %s94 = sphi 0, %s93
      %s110 = sphi 0, %s94
      %s118 = sphi 0, %s120
      %s121 = sphi 0, %s118
      %s122 = sphi 0, %s121
      %s138 = sphi 0, %s122
    $region4: #{tpu_custom_call.1} parent=1 // loop_header_branch
      %22 = sbr.rel (%p20) target = $region8
    $region5: #{tpu_custom_call.1} parent=1 // loop_body
      %s24 = ssub.s32 %s19, 1
      %s25 = ssub.s32 %s19, 2
      %s32 = sadd.s32 1, %s27
      %p33 = scmp.ge.s32.totalorder %s32, 1
      %s34 = scalar_select %p33, 0, %s32
      %s35 = sadd.s32 1, %s26
      %s36 = scalar_select %p33, %s35, %s26
      %p37 = scmp.ge.s32.totalorder %s36, 4
      %s38 = scalar_select %p37, 0, %s36
      %s40 = sadd.s32 %s39, 1
      %p43 = scmp.eq.s32.totalorder %s19, 3
      %p44 = scmp.ne.s32.totalorder %s39, %s41
      %p45 = scmp.eq.s32.totalorder %s19, 0
      %p46 = por %p44, %p45
      %p47 = scmp.ne.s32.totalorder %s39, %s41
      %p48 = scmp.eq.s32.totalorder %s24, 3
      %p49 = por %p47, %p48
      %p50 = scmp.ne.s32.totalorder %s41, %s42
      %p51 = scmp.eq.s32.totalorder %s24, 0
      %p52 = por %p50, %p51
      %p53 = scmp.ne.s32.totalorder %s41, %s42
      %p54 = scmp.eq.s32.totalorder %s25, 3
      %p55 = por %p53, %p54
      %p57 = scmp.ne.s32.totalorder %s42, %s56
      %p58 = scmp.eq.s32.totalorder %s25, 0
      %p59 = por %p57, %p58
      %s60 = ssub.s32 %s26, %s38
      %p61 = scmp.eq.s32.totalorder %s60, 0
      %s63 = sadd.s32 %s62, 1
      %s64 = scalar_select %p61, %s62, %s63
      %p67 = pneg %p61
      %p68 = scmp.eq.s32.totalorder %s19, 3
      %p69 = por %p67, %p68
      %p70 = scmp.ne.s32.totalorder %s62, %s65
      %p71 = scmp.eq.s32.totalorder %s19, 0
      %p72 = por %p70, %p71
      %p73 = scmp.ne.s32.totalorder %s62, %s65
      %p74 = scmp.eq.s32.totalorder %s24, 3
      %p75 = por %p73, %p74
      %p76 = scmp.ne.s32.totalorder %s65, %s66
      %p77 = scmp.eq.s32.totalorder %s24, 0
      %p78 = por %p76, %p77
      %p79 = scmp.ne.s32.totalorder %s65, %s66
      %p80 = scmp.eq.s32.totalorder %s25, 3
      %p81 = por %p79, %p80
      %p83 = scmp.ne.s32.totalorder %s66, %s82
      %p84 = scmp.eq.s32.totalorder %s25, 0
      %p85 = por %p83, %p84
      %s86 = ssub.s32 %s26, %s38
      %s87 = ssub.s32 %s27, %s34
      %s88 = sor.u32 %s86, %s87
      %p89 = scmp.eq.s32.totalorder %s88, 0
      %s91 = sadd.s32 %s90, 1
      %s92 = scalar_select %p89, %s90, %s91
      %p95 = pneg %p89
      %p96 = scmp.eq.s32.totalorder %s19, 3
      %p97 = por %p95, %p96
      %p98 = scmp.ne.s32.totalorder %s90, %s93
      %p99 = scmp.eq.s32.totalorder %s19, 0
      %p100 = por %p98, %p99
      %p101 = scmp.ne.s32.totalorder %s90, %s93
      %p102 = scmp.eq.s32.totalorder %s24, 3
      %p103 = por %p101, %p102
      %p104 = scmp.ne.s32.totalorder %s93, %s94
      %p105 = scmp.eq.s32.totalorder %s24, 0
      %p106 = por %p104, %p105
      %p107 = scmp.ne.s32.totalorder %s93, %s94
      %p108 = scmp.eq.s32.totalorder %s25, 3
      %p109 = por %p107, %p108
      %p111 = scmp.ne.s32.totalorder %s94, %s110
      %p112 = scmp.eq.s32.totalorder %s25, 0
      %p113 = por %p111, %p112
      %s114 = ssub.s32 %s26, %s38
      %s115 = ssub.s32 %s27, %s34
      %s116 = sor.u32 %s114, %s115
      %p117 = scmp.eq.s32.totalorder %s116, 0
      %s119 = sadd.s32 %s118, 1
      %s120 = scalar_select %p117, %s118, %s119
      %p123 = pneg %p117
      %p124 = scmp.eq.s32.totalorder %s19, 3
      %p125 = por %p123, %p124
      %p126 = scmp.ne.s32.totalorder %s118, %s121
      %p127 = scmp.eq.s32.totalorder %s19, 0
      %p128 = por %p126, %p127
      %p129 = scmp.ne.s32.totalorder %s118, %s121
      %p130 = scmp.eq.s32.totalorder %s24, 3
      %p131 = por %p129, %p130
      %p132 = scmp.ne.s32.totalorder %s121, %s122
      %p133 = scmp.eq.s32.totalorder %s24, 0
      %p134 = por %p132, %p133
      %p135 = scmp.ne.s32.totalorder %s121, %s122
      %p136 = scmp.eq.s32.totalorder %s25, 3
      %p137 = por %p135, %p136
      %p139 = scmp.ne.s32.totalorder %s122, %s138
      %p140 = scmp.eq.s32.totalorder %s25, 0
      %p141 = por %p139, %p140
      %p142 = scmp.le.s32.totalorder 1, %s19
      %p143 = scmp.lt.s32.totalorder %s19, 5
      %p144 = pnand %p142, %p143
      %p145 = pneg %p144
      // Predicated region
      $region9: #{tpu_custom_call.1} parent=5 // pred_check
        _
      $region10: #{tpu_custom_call.1} parent=5 // pred_check_branch
        %147 = sbr.rel (%p144) target = $region12
      $region11: #{tpu_custom_call.1} parent=5 // pred_region
        %s148 = ssub.s32 %s19, 1
        // Predicated region
        $region13: #{tpu_custom_call.1} parent=11 // pred_check
          %p149 = pneg %p52
        $region14: #{tpu_custom_call.1} parent=11 // pred_check_branch
          %151 = sbr.rel (%p149) target = $region16
        $region15: #{tpu_custom_call.1} parent=11 // pred_region
          _
        $region16: #{tpu_custom_call.1} parent=11 // pred_fallthru
          _
      $region12: #{tpu_custom_call.1} parent=5 // pred_fallthru
        _
      %p152 = scmp.lt.s32.totalorder %s19, 4
      // Predicated region
      $region17: #{tpu_custom_call.1} parent=5 // pred_check
        %p153 = pneg %p152
      $region18: #{tpu_custom_call.1} parent=5 // pred_check_branch
        %155 = sbr.rel (%p153) target = $region20
      $region19: #{tpu_custom_call.1} parent=5 // pred_region
        // Predicated region
        $region21: #{tpu_custom_call.1} parent=19 // pred_check
          %p156 = pneg %p72
        $region22: #{tpu_custom_call.1} parent=19 // pred_check_branch
          %158 = sbr.rel (%p156) target = $region24
        $region23: #{tpu_custom_call.1} parent=19 // pred_region
          %s159 = sand.u32 %s62, 1
          %s160 = scalar_lea.sflag [#allocation4], %s159
          %s161 = sand.u32 %s62, 1
          %s162 = smul.addr %s161, 2
          %s163 = scalar_lea.vmem [#allocation3], %s162
          %165 = vsyncadd %s160, 0
          %s166 = smul.addr %s26, 2
          %s167 = scalar_lea.hbm %s1, %s166
          %s169 = sshll.u32 %s167, 4
          %s170 = int_to_ptr.hbm [resolvable:$true] %s169
          %s171 = sshll.u32 %s163, 4
          %s172 = int_to_ptr.vmem [resolvable:$true] %s171
          %174 = dma.hbm_to_vmem [thread:$0]  %s170, 32, %s172, %s160
        $region24: #{tpu_custom_call.1} parent=19 // pred_fallthru
          _
        // Predicated region
        $region25: #{tpu_custom_call.1} parent=19 // pred_check
          %p175 = pneg %p100
        $region26: #{tpu_custom_call.1} parent=19 // pred_check_branch
          %177 = sbr.rel (%p175) target = $region28
        $region27: #{tpu_custom_call.1} parent=19 // pred_region
          %s178 = sand.u32 %s90, 1
          %s179 = scalar_lea.sflag [#allocation7], %s178
          %s180 = sand.u32 %s90, 1
          %s181 = smul.addr %s180, 16
          %s182 = scalar_lea.vmem [#allocation6], %s181
          %184 = vsyncadd %s179, 0
          %s185 = smul.addr %s26, 2
          %s186 = sadd.s32 %s27, %s185
          %s187 = smul.addr %s186, 8
          %s188 = scalar_lea.hbm %s2, %s187
          %s189 = sshll.u32 %s188, 4
          %s190 = int_to_ptr.hbm [resolvable:$true] %s189
          %s191 = sshll.u32 %s182, 4
          %s192 = int_to_ptr.vmem [resolvable:$true] %s191
          %197 = dma.hbm_to_vmem [thread:$0]  %s190, 256, %s192, %s179, 128, 128, 8
        $region28: #{tpu_custom_call.1} parent=19 // pred_fallthru
          _
      $region20: #{tpu_custom_call.1} parent=5 // pred_fallthru
        _
      %p198 = scmp.le.s32.totalorder 1, %s19
      %p199 = scmp.lt.s32.totalorder %s19, 5
      %p200 = pnand %p198, %p199
      %p201 = pneg %p200
      // Predicated region
      $region29: #{tpu_custom_call.1} parent=5 // pred_check
        _
      $region30: #{tpu_custom_call.1} parent=5 // pred_check_branch
        %203 = sbr.rel (%p200) target = $region32
      $region31: #{tpu_custom_call.1} parent=5 // pred_region
        %s204 = ssub.s32 %s19, 1
        %s205 = sand.u32 %s65, 1
        %s206 = scalar_lea.sflag [#allocation4], %s205
        %s207 = sand.u32 %s65, 1
        %s208 = smul.addr %s207, 2
        %s209 = scalar_lea.vmem [#allocation3], %s208
        // Predicated region
        $region33: #{tpu_custom_call.1} parent=31 // pred_check
          %p210 = pneg %p78
        $region34: #{tpu_custom_call.1} parent=31 // pred_check_branch
          %212 = sbr.rel (%p210) target = $region36
        $region35: #{tpu_custom_call.1} parent=31 // pred_region
          %214 = dma.done %s206, 32
        $region36: #{tpu_custom_call.1} parent=31 // pred_fallthru
          _
        %s215 = sand.u32 %s93, 1
        %s216 = scalar_lea.sflag [#allocation7], %s215
        %s217 = sand.u32 %s93, 1
        %s218 = smul.addr %s217, 16
        %s219 = scalar_lea.vmem [#allocation6], %s218
        // Predicated region
        $region37: #{tpu_custom_call.1} parent=31 // pred_check
          %p220 = pneg %p106
        $region38: #{tpu_custom_call.1} parent=31 // pred_check_branch
          %222 = sbr.rel (%p220) target = $region40
        $region39: #{tpu_custom_call.1} parent=31 // pred_region
          %224 = dma.done %s216, 256
        $region40: #{tpu_custom_call.1} parent=31 // pred_fallthru
          _
        %p225 = pneg %p52
        %p226 = pneg %p49
        %s227 = sand.u32 %s65, 1
        %s228 = scalar_lea.sflag [#allocation4], %s227
        %s229 = sand.u32 %s65, 1
        %s230 = smul.addr %s229, 2
        %s231 = scalar_lea.vmem [#allocation3], %s230
        %p232 = pneg %p78
        %p233 = pneg %p75
        %s234 = sand.u32 %s93, 1
        %s235 = scalar_lea.sflag [#allocation7], %s234
        %s236 = sand.u32 %s93, 1
        %s237 = smul.addr %s236, 16
        %s238 = scalar_lea.vmem [#allocation6], %s237
        %p239 = pneg %p106
        %p240 = pneg %p103
        %p241 = pneg %p134
        %p242 = pneg %p131
        %s243 = sand.u32 %s121, 1
        %s244 = scalar_lea.sflag [#allocation5], %s243
        %s245 = sand.u32 %s121, 1
        %s246 = smul.addr %s245, 2
        %s247 = scalar_lea.vmem [#allocation8], %s246
        %s248 = sld [smem:[#allocation2]]
        %v249 = vld [vmem:[%s209] sm:$0x3]
        %v250 = vld [vmem:[%s219] sm:$0xff]
        %v251 = vld [vmem:[%s219 + $0x8] sm:$0xff]
        %v253 = vrot.slane %v249, 1
        %v254 = vperm.slane %v249, 0
        %v255 = vperm.slane %v253, 0
        %v258 = vmul.f32 %v250, %v254
        %v259 = vmul.f32 %v251, %v255
        %vm260 = vcmask 261120
        %v261 = vsel %vm260, %v258, 0.0
        %262 = vadd.xlane.f32.xlu0 %v261
        %v263 = vpop.xlane.xlu0 %262
        %v264 = vsel %vm260, %v259, 0.0
        %265 = vadd.xlane.f32.xlu0 %v264
        %v266 = vpop.xlane.xlu0 %265
        %v267 = vstv %s248
        %v268 = vadd.f32 %v263, %v267
        %v269 = vadd.f32 %v266, %v267
        %v272 = vlaneseq
        %v273 = vand.u32 %v272, 127
        %v274 = vperm.slane %v268, %v273
        %v275 = vperm.slane %v269, %v273
        %vm276 = vcmask 1041409
        %v277 = vsel %vm276, %v275, %v274
        %vm279 = vcmask 58368
        %280 = vst.msk [vmem:[%s247] sm:$0x3] %vm279, %v277
        %s281 = sand.u32 %s121, 1
        %s282 = scalar_lea.sflag [#allocation5], %s281
        %s283 = sand.u32 %s121, 1
        %s284 = smul.addr %s283, 2
        %s285 = scalar_lea.vmem [#allocation8], %s284
        // Predicated region
        $region41: #{tpu_custom_call.1} parent=31 // pred_check
          %p286 = pneg %p131
        $region42: #{tpu_custom_call.1} parent=31 // pred_check_branch
          %288 = sbr.rel (%p286) target = $region44
        $region43: #{tpu_custom_call.1} parent=31 // pred_region
          %290 = vsyncadd %s282, 0
          %s291 = sadd.s32 %s29, %s28
          %s292 = smul.addr %s291, 2
          %s293 = scalar_lea.hbm %s3, %s292
          %s295 = sshll.u32 %s285, 4
          %s296 = int_to_ptr.vmem [resolvable:$true] %s295
          %s297 = sshll.u32 %s293, 4
          %s298 = int_to_ptr.hbm [resolvable:$true] %s297
          %300 = dma.vmem_to_hbm [thread:$0]  %s296, 32, %s298, %s282
        $region44: #{tpu_custom_call.1} parent=31 // pred_fallthru
          _
      $region32: #{tpu_custom_call.1} parent=5 // pred_fallthru
        _
      %p301 = scmp.le.s32.totalorder 2, %s19
      // Predicated region
      $region45: #{tpu_custom_call.1} parent=5 // pred_check
        %p302 = pneg %p301
      $region46: #{tpu_custom_call.1} parent=5 // pred_check_branch
        %304 = sbr.rel (%p302) target = $region48
      $region47: #{tpu_custom_call.1} parent=5 // pred_region
        %s305 = ssub.s32 %s19, 2
        // Predicated region
        $region49: #{tpu_custom_call.1} parent=47 // pred_check
          %p306 = pneg %p137
        $region50: #{tpu_custom_call.1} parent=47 // pred_check_branch
          %308 = sbr.rel (%p306) target = $region52
        $region51: #{tpu_custom_call.1} parent=47 // pred_region
          %s309 = sand.u32 %s122, 1
          %s310 = scalar_lea.sflag [#allocation5], %s309
          %s311 = sand.u32 %s122, 1
          %s312 = smul.addr %s311, 2
          %s313 = scalar_lea.vmem [#allocation8], %s312
          %315 = dma.done %s310, 32
        $region52: #{tpu_custom_call.1} parent=47 // pred_fallthru
          _
      $region48: #{tpu_custom_call.1} parent=5 // pred_fallthru
        _
    $region6: #{tpu_custom_call.1} parent=1 // loop_footer
      %s23 = sadd.s32 1, %s19
    $region7: #{tpu_custom_call.1} parent=1 // loop_footer_branch
      %18 = sbr.rel target = $region3
    $region8: #{tpu_custom_call.1} parent=1 // loop_exit
      _
    %316 = vsyncpa [#allocation4], 1
    %s317 = scalar_lea.sflag [#allocation4], 1
    %318 = vsyncpa %s317, 1
    %319 = vsyncpa [#allocation7], 1
    %s320 = scalar_lea.sflag [#allocation7], 1
    %321 = vsyncpa %s320, 1
    %322 = vsyncpa [#allocation5], 1
    %s323 = scalar_lea.sflag [#allocation5], 1
    %324 = vsyncpa %s323, 1

</llo_original>
